<compile_context>
chip_gen: v7x
topology: tpu7x:2x2x1
jax: 0.10.0
libtpu: 0.0.40
codegen_flags: <defaults>
</compile_context>

<pallas_src>
import functools

import jax
import jax.numpy as jnp
from jax.experimental import pallas as pl
from jax.experimental.pallas import tpu as pltpu

EPSILON = 1e-7

# Per-chunk f32 intermediate budget for the in-kernel accumulation loop.
_CHUNK_BYTES = 256 * 1024
_MAX_CHUNK_ROWS = 512


def _round_up(x, m):
    return ((x + m - 1) // m) * m


def _row_multiple(*dtypes):
    """Sublane-packing multiple for the block's second-to-last dim."""
    m = 8
    for dt in dtypes:
        itemsize = jnp.dtype(dt).itemsize
        m = max(m, 8 * max(1, 4 // itemsize))  # f32->8, bf16->16, int8->32
    return m


def _vmem_capacity_bytes():
    try:
        return getattr(pltpu.get_tpu_info(), "vmem_capacity_bytes", None)
    except Exception:  # no TPU visible at trace time / interpret mode
        return None


def _choose_tiling(M, C, yp_dtype, yt_dtype):
    """Pick (block_rows, chunk_rows, num_chunks, vmem_limit)."""
    row_mult = _row_multiple(yp_dtype, yt_dtype)
    bytes_per_row = C * (jnp.dtype(yp_dtype).itemsize + jnp.dtype(yt_dtype).itemsize)

    cap = _vmem_capacity_bytes()
    if cap is not None and cap >= 100 * 1024 * 1024:
        # v5e / v6e: 128 MiB physical VMEM -> big blocks, raised scoped limit.
        target_block_bytes = 12 * 1024 * 1024   # both inputs, single buffer
        vmem_limit = 64 * 1024 * 1024
    else:
        # v7x (64 MiB physical / 32 MiB default scoped) or unknown: conservative.
        target_block_bytes = 4 * 1024 * 1024
        vmem_limit = 32 * 1024 * 1024

    # Chunk size for the in-kernel loop: bound the f32 working set per chunk.
    chunk_rows = _CHUNK_BYTES // (C * 4)
    chunk_rows = max(row_mult, min(_MAX_CHUNK_ROWS,
                                   (chunk_rows // row_mult) * row_mult))

    # Row-tile size: big enough to hide the ~0.35 us/step pipeline overhead,
    # small enough that 2 inputs x 2 buffers fits scoped VMEM and the grid
    # has >= 2 steps (so v7x's second TensorCore gets work).
    rows = target_block_bytes // max(bytes_per_row, 1)
    rows = max(row_mult, (rows // row_mult) * row_mult)
    half = _round_up(pl.cdiv(M, 2), row_mult)
    rows = min(rows, max(row_mult, half))

    if rows >= chunk_rows:
        rows = (rows // chunk_rows) * chunk_rows
        num_chunks = rows // chunk_rows
    else:
        chunk_rows = rows
        num_chunks = 1
    return rows, chunk_rows, num_chunks, vmem_limit


def _cce_kernel(yp_ref, yt_ref, out_ref, *, block_rows, chunk_rows, num_chunks,
                rows_in_last_block, needs_mask):
    C = yp_ref.shape[-1]
    eps = jnp.float32(EPSILON)
    one = jnp.float32(1.0)

    if needs_mask:
        # Only the last grid block is ragged; full blocks get limit==block_rows.
        is_last = pl.program_id(0) == pl.num_programs(0) - 1
        row_limit = jnp.where(is_last, jnp.int32(rows_in_last_block),
                              jnp.int32(block_rows))

    def compute_chunk(yp_raw, yt_raw, start_row, acc):
        yp = yp_raw.astype(jnp.float32)
        yt = yt_raw.astype(jnp.float32)

        yp_c = jnp.clip(yp, eps, one - eps)
        log_yp = jnp.log(yp_c)
        log_1m_yp = jnp.log(one - yp_c)
        # NOTE: the reference's min(log(1-eps), max(log(eps), .)) clamps are
        # redundant after the clip (<= 1 ulp at the clip boundary) -> dropped.
        # yt*a + (1-yt)*b  ==  b + yt*(a - b)
        term = log_1m_yp + yt * (log_yp - log_1m_yp)

        if needs_mask:
            row = start_row + jax.lax.broadcasted_iota(
                jnp.int32, (chunk_rows, 1), 0)
            # Value-level select: discards NaN/Inf from Pallas-padded rows.
            term = jnp.where(row < row_limit, term, jnp.float32(0.0))

        # Fold rows on an exact sublane-tile boundary -> pure VPU adds
        # (single cross-lane reduce happens once in the JAX wrapper).
        return acc + jnp.sum(term.reshape(chunk_rows // 8, 8, C), axis=0)

    acc0 = jnp.zeros((8, C), jnp.float32)
    if num_chunks == 1:
        acc = compute_chunk(yp_ref[...], yt_ref[...], 0, acc0)
    else:
        def body(c, acc):
            start = pl.multiple_of(c * chunk_rows, chunk_rows)
            return compute_chunk(yp_ref[pl.ds(start, chunk_rows), :],
                                 yt_ref[pl.ds(start, chunk_rows), :],
                                 start, acc)
        acc = jax.lax.fori_loop(0, num_chunks, body, acc0)

    out_ref[...] = acc.reshape(1, 8, C)


def clipped_cross_entropy_loss(y_pred, y_true, *, reduction="mean"):
    """Pallas implementation of ClippedCrossEntropyLoss.

    y_pred: (M, C) float32/bfloat16 probabilities.
    y_true: (M, C) float32/bfloat16/int8/bool targets.
    Returns a scalar float32 for reduction in {'mean', 'sum'}.
    """
    assert y_pred.shape == y_true.shape
    assert y_pred.ndim == 2
    # TODO(synk): reduction='none' (per-row loss vector) is not implemented
    # in-kernel; it would need a per-row cross-lane reduce + row-shaped output.
    assert reduction in ("mean", "sum")
    # TODO(synk): for vocab-scale C, add a second grid axis over the class dim.

    if y_true.dtype == jnp.bool_:
        y_true = y_true.astype(jnp.int8)

    M, C = y_pred.shape
    block_rows, chunk_rows, num_chunks, vmem_limit = _choose_tiling(
        M, C, y_pred.dtype, y_true.dtype)

    num_blocks = pl.cdiv(M, block_rows)
    rows_in_last_block = M - (num_blocks - 1) * block_rows
    needs_mask = rows_in_last_block != block_rows

    kernel = functools.partial(
        _cce_kernel,
        block_rows=block_rows,
        chunk_rows=chunk_rows,
        num_chunks=num_chunks,
        rows_in_last_block=rows_in_last_block,
        needs_mask=needs_mask,
    )

    in_bytes = M * C * (jnp.dtype(y_pred.dtype).itemsize
                        + jnp.dtype(y_true.dtype).itemsize)
    out_bytes = num_blocks * 8 * C * 4
    cost = pl.CostEstimate(
        flops=7 * M * C,
        transcendentals=2 * M * C,
        bytes_accessed=in_bytes + out_bytes,
    )

    partials = pl.pallas_call(
        kernel,
        out_shape=jax.ShapeDtypeStruct((num_blocks, 8, C), jnp.float32),
        grid=(num_blocks,),
        in_specs=[
            pl.BlockSpec((block_rows, C), lambda i: (i, 0)),
            pl.BlockSpec((block_rows, C), lambda i: (i, 0)),
        ],
        out_specs=pl.BlockSpec((1, 8, C), lambda i: (i, 0, 0)),
        compiler_params=pltpu.CompilerParams(
            dimension_semantics=("parallel",),
            vmem_limit_bytes=vmem_limit,
        ),
        cost_estimate=cost,
    )(y_pred, y_true)

    total = jnp.sum(partials)
    if reduction == "mean":
        return total / jnp.float32(M)
    return total


def _reference(y_pred, y_true, epsilon=EPSILON, reduction="mean"):
    yp = jnp.clip(y_pred.astype(jnp.float32), epsilon, 1 - epsilon)
    log_yp = jnp.log(yp)
    log_1m_yp = jnp.log(1 - yp)
    log_eps = jnp.log(jnp.float32(epsilon))
    log_1me = jnp.log(jnp.float32(1 - epsilon))
    cl_log_yp = jnp.minimum(log_1me, jnp.maximum(log_eps, log_yp))
    cl_log_1m_yp = jnp.minimum(log_1me, jnp.maximum(log_eps, log_1m_yp))
    yt = y_true.astype(jnp.float32)
    loss_pos = jnp.sum(yt * cl_log_yp, axis=-1)
    loss_neg = jnp.sum((1 - yt) * cl_log_1m_yp, axis=-1)
    loss = loss_pos + loss_neg
    if reduction == "mean":
        return jnp.mean(loss)
    return jnp.sum(loss)


if __name__ == "__main__":
    key = jax.random.PRNGKey(0)
    k1, k2, k3, k4, k5, k6 = jax.random.split(key, 6)

    # Case 1: M divisible by the row multiple, f32/f32, reduction='mean'.
    M, C = 16, 128
    y_pred = jax.nn.sigmoid(jax.random.normal(k1, (M, C), dtype=jnp.float32))
    y_true = (jax.random.uniform(k2, (M, C)) > 0.5).astype(jnp.float32)

    out = jax.block_until_ready(clipped_cross_entropy_loss(y_pred, y_true))
    ref = _reference(y_pred, y_true)
    assert jnp.allclose(out, ref, rtol=1e-5, atol=1e-5), (out, ref)

    # Case 2: ragged M (exercises the no-pad + in-kernel row-mask path).
    M2 = 13
    y_pred2 = jax.nn.sigmoid(jax.random.normal(k3, (M2, C), dtype=jnp.float32))
    y_true2 = (jax.random.uniform(k4, (M2, C)) > 0.5).astype(jnp.float32)

    out2 = jax.block_until_ready(clipped_cross_entropy_loss(y_pred2, y_true2))
    ref2 = _reference(y_pred2, y_true2)
    assert jnp.allclose(out2, ref2, rtol=1e-5, atol=1e-5), (out2, ref2)

    # Case 3: reduction='sum'.
    out3 = jax.block_until_ready(
        clipped_cross_entropy_loss(y_pred, y_true, reduction="sum"))
    ref3 = _reference(y_pred, y_true, reduction="sum")
    assert jnp.allclose(out3, ref3, rtol=1e-5, atol=1e-4), (out3, ref3)

    # Case 4: bf16 predictions + int8 binary targets (low-HBM-traffic path,
    # exercises the 16/32-row sublane-packing alignment).
    M4 = 64
    y_pred4 = jax.nn.sigmoid(
        jax.random.normal(k5, (M4, C), dtype=jnp.float32)).astype(jnp.bfloat16)
    y_true4 = (jax.random.uniform(k6, (M4, C)) > 0.5).astype(jnp.int8)

    out4 = jax.block_until_ready(clipped_cross_entropy_loss(y_pred4, y_true4))
    ref4 = _reference(y_pred4, y_true4)
    assert jnp.allclose(out4, ref4, rtol=1e-4, atol=1e-4), (out4, ref4)

    print("KERNEL_OK")
</pallas_src>

<mosaic_0001>
module attributes {stable_mosaic.version = 11 : i64} {
  func.func @_cce_kernel(%arg0: i32, %arg1: memref<8x128xf32, #tpu.memory_space<vmem>>, %arg2: memref<8x128xf32, #tpu.memory_space<vmem>>, %arg3: memref<1x8x128xf32, #tpu.memory_space<vmem>>) attributes {dimension_semantics = [#tpu.dimension_semantics<parallel>], iteration_bounds = array<i64: 2>, scalar_prefetch = 0 : i64, scratch_operands = 0 : i64, tpu.core_type = #tpu.core_type<tc>, window_params = [{transform_indices = @transform_0, window_bounds = array<i64: 8, 128>}, {transform_indices = @transform_1, window_bounds = array<i64: 8, 128>}, {transform_indices = @transform_2, window_bounds = array<i64: 1, 8, 128>}]} {
    %cst = arith.constant 0.000000e+00 : f32
    %0 = vector.broadcast %cst : f32 to vector<8x128xf32>
    %c0 = arith.constant 0 : index
    %c0_0 = arith.constant 0 : index
    %1 = vector.load %arg1[%c0, %c0_0] : memref<8x128xf32, #tpu.memory_space<vmem>>, vector<8x128xf32>
    %c0_1 = arith.constant 0 : index
    %c0_2 = arith.constant 0 : index
    %2 = vector.load %arg2[%c0_1, %c0_2] : memref<8x128xf32, #tpu.memory_space<vmem>>, vector<8x128xf32>
    %cst_3 = arith.constant 1.000000e+00 : f32
    %cst_4 = arith.constant 1.000000e-07 : f32
    %3 = arith.subf %cst_3, %cst_4 : f32
    %cst_5 = arith.constant 1.000000e-07 : f32
    %4 = vector.broadcast %cst_5 : f32 to vector<8x128xf32>
    %5 = arith.maximumf %4, %1 : vector<8x128xf32>
    %6 = vector.broadcast %3 : f32 to vector<8x128xf32>
    %7 = arith.minimumf %6, %5 : vector<8x128xf32>
    %8 = math.log %7 : vector<8x128xf32>
    %cst_6 = arith.constant 1.000000e+00 : f32
    %9 = vector.broadcast %cst_6 : f32 to vector<8x128xf32>
    %10 = arith.subf %9, %7 : vector<8x128xf32>
    %11 = math.log %10 : vector<8x128xf32>
    %12 = arith.subf %8, %11 : vector<8x128xf32>
    %13 = arith.mulf %2, %12 : vector<8x128xf32>
    %14 = arith.addf %11, %13 : vector<8x128xf32>
    %15 = vector.shape_cast %14 : vector<8x128xf32> to vector<1x8x128xf32>
    %cst_7 = arith.constant dense<0.000000e+00> : vector<8x128xf32>
    %16 = vector.multi_reduction <add>, %15, %cst_7 [0] : vector<1x8x128xf32> to vector<8x128xf32>
    %17 = arith.addf %0, %16 : vector<8x128xf32>
    %18 = vector.shape_cast %17 : vector<8x128xf32> to vector<1x8x128xf32>
    %c0_8 = arith.constant 0 : index
    %c0_9 = arith.constant 0 : index
    %c0_10 = arith.constant 0 : index
    %19 = vector.load %arg3[%c0_8, %c0_9, %c0_10] : memref<1x8x128xf32, #tpu.memory_space<vmem>>, vector<1x8x128xf32>
    tpu.vector_store %arg3[%c0_8, %c0_9, %c0_10], %18 {strides = array<i32>} : memref<1x8x128xf32, #tpu.memory_space<vmem>>, vector<1x8x128xf32>,
    return
  }
  func.func @transform_0(%arg0: i32) -> (i32, i32) {
    %c0_i32 = arith.constant 0 : i32
    %c0_i32_0 = arith.constant 0 : i32
    return %arg0, %c0_i32 : i32, i32
  }
  func.func @transform_1(%arg0: i32) -> (i32, i32) {
    %c0_i32 = arith.constant 0 : i32
    %c0_i32_0 = arith.constant 0 : i32
    return %arg0, %c0_i32 : i32, i32
  }
  func.func @transform_2(%arg0: i32) -> (i32, i32, i32) {
    %c0_i32 = arith.constant 0 : i32
    %c0_i32_0 = arith.constant 0 : i32
    %c0_i32_1 = arith.constant 0 : i32
    return %arg0, %c0_i32, %c0_i32_0 : i32, i32, i32
  }
}

</mosaic_0001>

<llo_original>
// kernel: tpu_custom_call.1
$region0: #{tpu_custom_call.1}
  #allocation0 [shape = 'u32[]', space=smem, size = 0x4, offset = 0x4, fixed_abs, tag = 'smem constant byte address 0x4 - core index']
  #allocation1 [shape = 'u32[144,128]{1,0:T(1,128)}', space=vmem, size = 0x12000, scoped, tag = 'internal scratch']
  %s0 = inlined_call_operand.hbm [shape: f32[16,128], index: 0, kind: input, shape index: {}]
  %s1 = inlined_call_operand.hbm [shape: f32[16,128], index: 1, kind: input, shape index: {}]
  %s2 = inlined_call_operand.hbm [shape: f32[2,8,128], index: 2, kind: output, shape index: {}]
  %s3 = sld [smem:[#allocation0]]
  $region49: #{tpu_custom_call.1} parent=0
    _
  %s5 = ssub.s32 1, %s3
  %s6 = scalar_select 0, %s5, %s3
  $region1: #{tpu_custom_call.1} parent=0
    #allocation2 [shape = 'u8[8192]{0}', space=vmem, size = 0x2000, scoped, tag = 'input window, operand 0']
    #allocation3 [shape = 's32[2]{0}', space=sflag, size = 0x8, scoped, tag = 'scoped memory for tpu_custom_call.1']
    #allocation4 [shape = 's32[2]{0}', space=sflag, size = 0x8, scoped, tag = 'scoped memory for tpu_custom_call.1']
    #allocation5 [shape = 'u8[8192]{0}', space=vmem, size = 0x2000, scoped, tag = 'input window, operand 1']
    #allocation6 [shape = 's32[2]{0}', space=sflag, size = 0x8, scoped, tag = 'scoped memory for tpu_custom_call.1']
    #allocation7 [shape = 'u8[8192]{0}', space=vmem, size = 0x2000, scoped, tag = 'output window, operand 0']
    %7 = vsyncpa [#allocation3], 0
    %s8 = scalar_lea.sflag [#allocation3], 1
    %9 = vsyncpa %s8, 0
    %10 = vsyncpa [#allocation6], 0
    %s11 = scalar_lea.sflag [#allocation6], 1
    %12 = vsyncpa %s11, 0
    %13 = vsyncpa [#allocation4], 0
    %s14 = scalar_lea.sflag [#allocation4], 1
    %15 = vsyncpa %s14, 0
    loop: start=0, step=1, limit=4
    $region2: #{tpu_custom_call.1} parent=1 // loop_pre_header
      _
    $region3: #{tpu_custom_call.1} parent=1 // loop_header
      %s17 = sphi 0, %s21
      %p18 = scmp.ge.s32.totalorder %s17, 4
      %s27 = sphi 0, %s29
      %s30 = sphi 0, %s27
      %s31 = sphi 0, %s30
      %s47 = sphi 0, %s31
      %s53 = sphi 0, %s55
      %s56 = sphi 0, %s53
      %s57 = sphi 0, %s56
      %s73 = sphi 0, %s57
      %s79 = sphi 0, %s81
      %s82 = sphi 0, %s79
      %s83 = sphi 0, %s82
      %s99 = sphi 0, %s83
    $region4: #{tpu_custom_call.1} parent=1 // loop_header_branch
      %20 = sbr.rel (%p18) target = $region8
    $region5: #{tpu_custom_call.1} parent=1 // loop_body
      %s22 = ssub.s32 %s17, 1
      %s23 = ssub.s32 %s17, 2
      %s24 = sadd.s32 %s17, 1
      %s25 = ssub.s32 %s17, %s24
      %p26 = scmp.eq.s32.totalorder %s25, 0
      %s28 = sadd.s32 %s27, 1
      %s29 = scalar_select %p26, %s27, %s28
      %p32 = pneg %p26
      %p33 = scmp.eq.s32.totalorder %s17, 1
      %p34 = por %p32, %p33
      %p35 = scmp.ne.s32.totalorder %s27, %s30
      %p36 = scmp.eq.s32.totalorder %s17, 0
      %p37 = por %p35, %p36
      %p38 = scmp.ne.s32.totalorder %s27, %s30
      %p39 = scmp.eq.s32.totalorder %s22, 1
      %p40 = por %p38, %p39
      %p41 = scmp.ne.s32.totalorder %s30, %s31
      %p42 = scmp.eq.s32.totalorder %s22, 0
      %p43 = por %p41, %p42
      %p44 = scmp.ne.s32.totalorder %s30, %s31
      %p45 = scmp.eq.s32.totalorder %s23, 1
      %p46 = por %p44, %p45
      %p48 = scmp.ne.s32.totalorder %s31, %s47
      %p49 = scmp.eq.s32.totalorder %s23, 0
      %p50 = por %p48, %p49
      %s51 = ssub.s32 %s17, %s24
      %p52 = scmp.eq.s32.totalorder %s51, 0
      %s54 = sadd.s32 %s53, 1
      %s55 = scalar_select %p52, %s53, %s54
      %p58 = pneg %p52
      %p59 = scmp.eq.s32.totalorder %s17, 1
      %p60 = por %p58, %p59
      %p61 = scmp.ne.s32.totalorder %s53, %s56
      %p62 = scmp.eq.s32.totalorder %s17, 0
      %p63 = por %p61, %p62
      %p64 = scmp.ne.s32.totalorder %s53, %s56
      %p65 = scmp.eq.s32.totalorder %s22, 1
      %p66 = por %p64, %p65
      %p67 = scmp.ne.s32.totalorder %s56, %s57
      %p68 = scmp.eq.s32.totalorder %s22, 0
      %p69 = por %p67, %p68
      %p70 = scmp.ne.s32.totalorder %s56, %s57
      %p71 = scmp.eq.s32.totalorder %s23, 1
      %p72 = por %p70, %p71
      %p74 = scmp.ne.s32.totalorder %s57, %s73
      %p75 = scmp.eq.s32.totalorder %s23, 0
      %p76 = por %p74, %p75
      %s77 = ssub.s32 %s17, %s24
      %p78 = scmp.eq.s32.totalorder %s77, 0
      %s80 = sadd.s32 %s79, 1
      %s81 = scalar_select %p78, %s79, %s80
      %p84 = pneg %p78
      %p85 = scmp.eq.s32.totalorder %s17, 1
      %p86 = por %p84, %p85
      %p87 = scmp.ne.s32.totalorder %s79, %s82
      %p88 = scmp.eq.s32.totalorder %s17, 0
      %p89 = por %p87, %p88
      %p90 = scmp.ne.s32.totalorder %s79, %s82
      %p91 = scmp.eq.s32.totalorder %s22, 1
      %p92 = por %p90, %p91
      %p93 = scmp.ne.s32.totalorder %s82, %s83
      %p94 = scmp.eq.s32.totalorder %s22, 0
      %p95 = por %p93, %p94
      %p96 = scmp.ne.s32.totalorder %s82, %s83
      %p97 = scmp.eq.s32.totalorder %s23, 1
      %p98 = por %p96, %p97
      %p100 = scmp.ne.s32.totalorder %s83, %s99
      %p101 = scmp.eq.s32.totalorder %s23, 0
      %p102 = por %p100, %p101
      %p103 = scmp.le.s32.totalorder 1, %s17
      %p104 = scmp.lt.s32.totalorder %s17, 3
      %p105 = pnand %p103, %p104
      %p106 = pneg %p105
      // Predicated region
      $region9: #{tpu_custom_call.1} parent=5 // pred_check
        _
      $region10: #{tpu_custom_call.1} parent=5 // pred_check_branch
        %108 = sbr.rel (%p105) target = $region12
      $region11: #{tpu_custom_call.1} parent=5 // pred_region
        %s109 = ssub.s32 %s17, 1
      $region12: #{tpu_custom_call.1} parent=5 // pred_fallthru
        _
      %p110 = scmp.lt.s32.totalorder %s17, 2
      // Predicated region
      $region13: #{tpu_custom_call.1} parent=5 // pred_check
        %p111 = pneg %p110
      $region14: #{tpu_custom_call.1} parent=5 // pred_check_branch
        %113 = sbr.rel (%p111) target = $region16
      $region15: #{tpu_custom_call.1} parent=5 // pred_region
        // Predicated region
        $region17: #{tpu_custom_call.1} parent=15 // pred_check
          %p114 = pneg %p37
        $region18: #{tpu_custom_call.1} parent=15 // pred_check_branch
          %116 = sbr.rel (%p114) target = $region20
        $region19: #{tpu_custom_call.1} parent=15 // pred_region
          %s117 = sand.u32 %s27, 1
          %s118 = scalar_lea.sflag [#allocation3], %s117
          %s119 = sand.u32 %s27, 1
          %s120 = smul.addr %s119, 8
          %s121 = scalar_lea.vmem [#allocation2], %s120
          %s123 = ssub.s32 128, 128
          %124 = vsyncadd %s118, %s123
          %s125 = smul.addr %s17, 128
          %s126 = scalar_lea.hbm %s0, %s125
          %s128 = sshll.u32 %s121, 4
          %s129 = int_to_ptr.vmem [resolvable:$true] %s128
          %131 = dma.hbm_to_vmem [thread:$0]  %s126, 128, %s129, %s118
        $region20: #{tpu_custom_call.1} parent=15 // pred_fallthru
          _
        // Predicated region
        $region21: #{tpu_custom_call.1} parent=15 // pred_check
          %p132 = pneg %p63
        $region22: #{tpu_custom_call.1} parent=15 // pred_check_branch
          %134 = sbr.rel (%p132) target = $region24
        $region23: #{tpu_custom_call.1} parent=15 // pred_region
          %s135 = sand.u32 %s53, 1
          %s136 = scalar_lea.sflag [#allocation6], %s135
          %s137 = sand.u32 %s53, 1
          %s138 = smul.addr %s137, 8
          %s139 = scalar_lea.vmem [#allocation5], %s138
          %s141 = ssub.s32 128, 128
          %142 = vsyncadd %s136, %s141
          %s143 = smul.addr %s17, 128
          %s144 = scalar_lea.hbm %s1, %s143
          %s146 = sshll.u32 %s139, 4
          %s147 = int_to_ptr.vmem [resolvable:$true] %s146
          %149 = dma.hbm_to_vmem [thread:$0]  %s144, 128, %s147, %s136
        $region24: #{tpu_custom_call.1} parent=15 // pred_fallthru
          _
      $region16: #{tpu_custom_call.1} parent=5 // pred_fallthru
        _
      %p150 = scmp.le.s32.totalorder 1, %s17
      %p151 = scmp.lt.s32.totalorder %s17, 3
      %p152 = pnand %p150, %p151
      %p153 = pneg %p152
      // Predicated region
      $region25: #{tpu_custom_call.1} parent=5 // pred_check
        _
      $region26: #{tpu_custom_call.1} parent=5 // pred_check_branch
        %155 = sbr.rel (%p152) target = $region28
      $region27: #{tpu_custom_call.1} parent=5 // pred_region
        %s156 = ssub.s32 %s17, 1
        %s157 = sand.u32 %s30, 1
        %s158 = scalar_lea.sflag [#allocation3], %s157
        %s159 = sand.u32 %s30, 1
        %s160 = smul.addr %s159, 8
        %s161 = scalar_lea.vmem [#allocation2], %s160
        // Predicated region
        $region29: #{tpu_custom_call.1} parent=27 // pred_check
          %p162 = pneg %p43
        $region30: #{tpu_custom_call.1} parent=27 // pred_check_branch
          %164 = sbr.rel (%p162) target = $region32
        $region31: #{tpu_custom_call.1} parent=27 // pred_region
          %165 = dma.done %s158, 128
        $region32: #{tpu_custom_call.1} parent=27 // pred_fallthru
          _
        %s166 = sand.u32 %s56, 1
        %s167 = scalar_lea.sflag [#allocation6], %s166
        %s168 = sand.u32 %s56, 1
        %s169 = smul.addr %s168, 8
        %s170 = scalar_lea.vmem [#allocation5], %s169
        // Predicated region
        $region33: #{tpu_custom_call.1} parent=27 // pred_check
          %p171 = pneg %p69
        $region34: #{tpu_custom_call.1} parent=27 // pred_check_branch
          %173 = sbr.rel (%p171) target = $region36
        $region35: #{tpu_custom_call.1} parent=27 // pred_region
          %174 = dma.done %s167, 128
        $region36: #{tpu_custom_call.1} parent=27 // pred_fallthru
          _
        %s175 = sand.u32 %s30, 1
        %s176 = scalar_lea.sflag [#allocation3], %s175
        %s177 = sand.u32 %s30, 1
        %s178 = smul.addr %s177, 8
        %s179 = scalar_lea.vmem [#allocation2], %s178
        %p180 = pneg %p43
        %p181 = pneg %p40
        %s182 = sand.u32 %s56, 1
        %s183 = scalar_lea.sflag [#allocation6], %s182
        %s184 = sand.u32 %s56, 1
        %s185 = smul.addr %s184, 8
        %s186 = scalar_lea.vmem [#allocation5], %s185
        %p187 = pneg %p69
        %p188 = pneg %p66
        %p189 = pneg %p95
        %p190 = pneg %p92
        %s191 = sand.u32 %s82, 1
        %s192 = scalar_lea.sflag [#allocation4], %s191
        %s193 = sand.u32 %s82, 1
        %s194 = smul.addr %s193, 8
        %s195 = scalar_lea.vmem [#allocation7], %s194
        %v196 = vld [vmem:[%s161] sm:$0xff]
        %v197 = vld [vmem:[%s170] sm:$0xff]
        %v198 = vmax.f32 %v196, 1e-07
        %v199 = vmin.f32 %v198, 0.9999999
        %v200 = vlog2.pop %v199
        %v201 = vmul.f32 %v200, 0.6931472
        %v202 = vsub.f32 1.0, %v199
        %v203 = vlog2.pop %v202
        %v204 = vmul.f32 %v203, 0.6931472
        %v205 = vsub.f32 %v201, %v204
        %v206 = vmul.f32 %v197, %v205
        %v207 = vadd.f32 %v204, %v206
        %v208 = vadd.f32 %v207, 0.0
        %v209 = vadd.f32 %v208, 0.0
        %210 = vst [vmem:[%s195] sm:$0xff] %v209
        %s211 = sand.u32 %s82, 1
        %s212 = scalar_lea.sflag [#allocation4], %s211
        %s213 = sand.u32 %s82, 1
        %s214 = smul.addr %s213, 8
        %s215 = scalar_lea.vmem [#allocation7], %s214
        // Predicated region
        $region37: #{tpu_custom_call.1} parent=27 // pred_check
          %p216 = pneg %p92
        $region38: #{tpu_custom_call.1} parent=27 // pred_check_branch
          %218 = sbr.rel (%p216) target = $region40
        $region39: #{tpu_custom_call.1} parent=27 // pred_region
          %s220 = ssub.s32 128, 128
          %221 = vsyncadd %s212, %s220
          %s222 = smul.addr %s22, 128
          %s223 = scalar_lea.hbm %s2, %s222
          %s225 = sshll.u32 %s215, 4
          %s226 = int_to_ptr.vmem [resolvable:$true] %s225
          %228 = dma.vmem_to_hbm [thread:$0]  %s226, 128, %s223, %s212
        $region40: #{tpu_custom_call.1} parent=27 // pred_fallthru
          _
      $region28: #{tpu_custom_call.1} parent=5 // pred_fallthru
        _
      %p229 = scmp.le.s32.totalorder 2, %s17
      // Predicated region
      $region41: #{tpu_custom_call.1} parent=5 // pred_check
        %p230 = pneg %p229
      $region42: #{tpu_custom_call.1} parent=5 // pred_check_branch
        %232 = sbr.rel (%p230) target = $region44
      $region43: #{tpu_custom_call.1} parent=5 // pred_region
        %s233 = ssub.s32 %s17, 2
        // Predicated region
        $region45: #{tpu_custom_call.1} parent=43 // pred_check
          %p234 = pneg %p98
        $region46: #{tpu_custom_call.1} parent=43 // pred_check_branch
          %236 = sbr.rel (%p234) target = $region48
        $region47: #{tpu_custom_call.1} parent=43 // pred_region
          %s237 = sand.u32 %s83, 1
          %s238 = scalar_lea.sflag [#allocation4], %s237
          %s239 = sand.u32 %s83, 1
          %s240 = smul.addr %s239, 8
          %s241 = scalar_lea.vmem [#allocation7], %s240
          %242 = dma.done %s238, 128
        $region48: #{tpu_custom_call.1} parent=43 // pred_fallthru
          _
      $region44: #{tpu_custom_call.1} parent=5 // pred_fallthru
        _
    $region6: #{tpu_custom_call.1} parent=1 // loop_footer
      %s21 = sadd.s32 1, %s17
    $region7: #{tpu_custom_call.1} parent=1 // loop_footer_branch
      %16 = sbr.rel target = $region3
    $region8: #{tpu_custom_call.1} parent=1 // loop_exit
      _
    %243 = vsyncpa [#allocation3], 1
    %s244 = scalar_lea.sflag [#allocation3], 1
    %245 = vsyncpa %s244, 1
    %246 = vsyncpa [#allocation6], 1
    %s247 = scalar_lea.sflag [#allocation6], 1
    %248 = vsyncpa %s247, 1
    %249 = vsyncpa [#allocation4], 1
    %s250 = scalar_lea.sflag [#allocation4], 1
    %251 = vsyncpa %s250, 1

</llo_original>
